<compile_context>
chip_gen: v7x
topology: tpu7x:2x2x1
jax: 0.10.0
libtpu: 0.0.40
codegen_flags: <defaults>
</compile_context>

<pallas_src>
import functools

import jax
import jax.numpy as jnp
import numpy as np
from jax.experimental import pallas as pl
from jax.experimental.pallas import tpu as pltpu


def build_positional_encoding(max_len: int, d_model: int) -> jnp.ndarray:
    """Same construction as the PyTorch __init__ (deterministic)."""
    pos = jnp.arange(max_len, dtype=jnp.float32).reshape(-1, 1)
    div = jnp.power(
        10000.0, jnp.arange(0, d_model, 2, dtype=jnp.float32) / d_model
    )
    x = pos / div  # (max_len, d_model//2)
    pe = jnp.zeros((1, max_len, d_model), dtype=jnp.float32)
    pe = pe.at[:, :, 0::2].set(jnp.sin(x))
    pe = pe.at[:, :, 1::2].set(jnp.cos(x))
    return pe


# ---------------------------------------------------------------------------
# Kernels: pure elementwise VPU work on (1, TS, D) tiles.
# ---------------------------------------------------------------------------
def _pe_add_kernel(x_ref, pe_ref, o_ref):
    o_ref[...] = (x_ref[...] + pe_ref[...]).astype(o_ref.dtype)


def _pe_add_dropout_kernel(x_ref, pe_ref, m_ref, o_ref):
    # m_ref holds the pre-scaled inverted-dropout mask: keep/(1-p) or 0.
    o_ref[...] = ((x_ref[...] + pe_ref[...]) * m_ref[...]).astype(o_ref.dtype)


def _choose_seq_tile(S: int, D: int, itemsize: int,
                     budget_bytes: int = 2 * 1024 * 1024) -> int:
    """Largest seq-tile that divides S, is a multiple of 8, and fits a small
    per-block VMEM budget (so double-buffered x/pe/mask/out stay well under the
    scoped VMEM limit on every TPU generation)."""
    max_rows = max(8, budget_bytes // max(1, D * itemsize))
    for ts in range(min(S, max_rows), 0, -1):
        if S % ts == 0 and ts % 8 == 0:
            return ts
    # Fallback: full seq extent (block == full array dim is always legal).
    return S


@functools.partial(jax.jit, static_argnames=("dropout_rate", "train"))
def positional_encoding_forward(x, pe, key, *, dropout_rate=0.1, train=True):
    """x: (B, S, D), pe: (1, max_len, D), key: jax PRNG key (used when training)."""
    assert dropout_rate < 1.0, "dropout_rate must be < 1.0"
    B, S, D = x.shape
    itemsize = jnp.dtype(x.dtype).itemsize

    # Pre-slice + cast the PE table once in the wrapper (robust for any S, and
    # halves PE read bytes for bf16 activations).
    pe_s = pe[:, :S, :].astype(x.dtype)

    TS = _choose_seq_tile(S, D, itemsize)
    n_seq_tiles = S // TS

    apply_dropout = bool(train) and dropout_rate > 0.0

    x_spec = pl.BlockSpec((1, TS, D), lambda s, b: (b, s, 0))
    pe_spec = pl.BlockSpec((1, TS, D), lambda s, b: (0, s, 0))
    out_spec = pl.BlockSpec((1, TS, D), lambda s, b: (b, s, 0))

    compiler_params = pltpu.CompilerParams(
        dimension_semantics=("parallel", "parallel"),
    )

    if apply_dropout:
        keep = jax.random.bernoulli(key, 1.0 - dropout_rate, x.shape)
        mask = keep.astype(x.dtype) * jnp.asarray(
            1.0 / (1.0 - dropout_rate), dtype=x.dtype
        )
        cost = pl.CostEstimate(
            flops=2 * B * S * D,
            transcendentals=0,
            bytes_accessed=(3 * B * S * D + S * D) * itemsize,
        )
        return pl.pallas_call(
            _pe_add_dropout_kernel,
            out_shape=jax.ShapeDtypeStruct((B, S, D), x.dtype),
            grid=(n_seq_tiles, B),          # batch innermost -> PE tile stays resident
            in_specs=[x_spec, pe_spec, x_spec],
            out_specs=out_spec,
            compiler_params=compiler_params,
            cost_estimate=cost,
        )(x, pe_s, mask)
    else:
        cost = pl.CostEstimate(
            flops=B * S * D,
            transcendentals=0,
            bytes_accessed=(2 * B * S * D + S * D) * itemsize,
        )
        return pl.pallas_call(
            _pe_add_kernel,
            out_shape=jax.ShapeDtypeStruct((B, S, D), x.dtype),
            grid=(n_seq_tiles, B),
            in_specs=[x_spec, pe_spec],
            out_specs=out_spec,
            compiler_params=compiler_params,
            cost_estimate=cost,
        )(x, pe_s)


if __name__ == "__main__":
    # Small shapes consistent with the module: (batch, seq, d_model=512).
    B, S, D = 2, 8, 512
    MAX_LEN = 16
    DROPOUT = 0.1

    root = jax.random.PRNGKey(0)
    kx, kdrop = jax.random.split(root)
    x = jax.random.normal(kx, (B, S, D), dtype=jnp.float32)
    pe = build_positional_encoding(MAX_LEN, D)

    # Eval mode (dropout = identity): check exactly against the reference.
    y_eval = positional_encoding_forward(
        x, pe, kdrop, dropout_rate=DROPOUT, train=False
    )
    jax.block_until_ready(y_eval)
    ref = x + pe[:, :S, :]
    np.testing.assert_allclose(
        np.asarray(y_eval), np.asarray(ref), rtol=1e-6, atol=1e-6
    )

    # Train mode (inverted dropout).
    y_train = positional_encoding_forward(
        x, pe, kdrop, dropout_rate=DROPOUT, train=True
    )
    jax.block_until_ready(y_train)

    # Sanity: every train-mode element is either 0 or the eval value / (1-p).
    yt = np.asarray(y_train)
    ye = np.asarray(ref) / (1.0 - DROPOUT)
    ok = np.isclose(yt, 0.0, atol=1e-6) | np.isclose(yt, ye, rtol=1e-5, atol=1e-5)
    assert bool(ok.all())

    print("KERNEL_OK")
</pallas_src>

<mosaic_0001>
module attributes {stable_mosaic.version = 11 : i64} {
  func.func @_pe_add_kernel(%arg0: i32, %arg1: i32, %arg2: memref<1x8x512xf32, #tpu.memory_space<vmem>>, %arg3: memref<1x8x512xf32, #tpu.memory_space<vmem>>, %arg4: memref<1x8x512xf32, #tpu.memory_space<vmem>>) attributes {dimension_semantics = [#tpu.dimension_semantics<parallel>, #tpu.dimension_semantics<parallel>], iteration_bounds = array<i64: 1, 2>, scalar_prefetch = 0 : i64, scratch_operands = 0 : i64, tpu.core_type = #tpu.core_type<tc>, window_params = [{transform_indices = @transform_0, window_bounds = array<i64: 1, 8, 512>}, {transform_indices = @transform_1, window_bounds = array<i64: 1, 8, 512>}, {transform_indices = @transform_2, window_bounds = array<i64: 1, 8, 512>}]} {
    %c0 = arith.constant 0 : index
    %c0_0 = arith.constant 0 : index
    %c0_1 = arith.constant 0 : index
    %0 = vector.load %arg2[%c0, %c0_0, %c0_1] : memref<1x8x512xf32, #tpu.memory_space<vmem>>, vector<1x8x512xf32>
    %c0_2 = arith.constant 0 : index
    %c0_3 = arith.constant 0 : index
    %c0_4 = arith.constant 0 : index
    %1 = vector.load %arg3[%c0_2, %c0_3, %c0_4] : memref<1x8x512xf32, #tpu.memory_space<vmem>>, vector<1x8x512xf32>
    %2 = arith.addf %0, %1 : vector<1x8x512xf32>
    %c0_5 = arith.constant 0 : index
    %c0_6 = arith.constant 0 : index
    %c0_7 = arith.constant 0 : index
    %3 = vector.load %arg4[%c0_5, %c0_6, %c0_7] : memref<1x8x512xf32, #tpu.memory_space<vmem>>, vector<1x8x512xf32>
    tpu.vector_store %arg4[%c0_5, %c0_6, %c0_7], %2 {strides = array<i32>} : memref<1x8x512xf32, #tpu.memory_space<vmem>>, vector<1x8x512xf32>,
    return
  }
  func.func @transform_0(%arg0: i32, %arg1: i32) -> (i32, i32, i32) {
    %c0_i32 = arith.constant 0 : i32
    %c0_i32_0 = arith.constant 0 : i32
    return %arg1, %arg0, %c0_i32 : i32, i32, i32
  }
  func.func @transform_1(%arg0: i32, %arg1: i32) -> (i32, i32, i32) {
    %c0_i32 = arith.constant 0 : i32
    %c0_i32_0 = arith.constant 0 : i32
    %c0_i32_1 = arith.constant 0 : i32
    return %c0_i32, %arg0, %c0_i32_0 : i32, i32, i32
  }
  func.func @transform_2(%arg0: i32, %arg1: i32) -> (i32, i32, i32) {
    %c0_i32 = arith.constant 0 : i32
    %c0_i32_0 = arith.constant 0 : i32
    return %arg1, %arg0, %c0_i32 : i32, i32, i32
  }
}

</mosaic_0001>

<llo_original>
// kernel: positional_encoding_forward.1
$region0: #{positional_encoding_forward.1}
  #allocation0 [shape = 'u32[]', space=smem, size = 0x4, offset = 0x4, fixed_abs, tag = 'smem constant byte address 0x4 - core index']
  #allocation1 [shape = 'u32[144,128]{1,0:T(1,128)}', space=vmem, size = 0x12000, scoped, tag = 'internal scratch']
  %s0 = inlined_call_operand.hbm [shape: f32[2,8,512], index: 0, kind: input, shape index: {}]
  %s1 = inlined_call_operand.vmem [shape: f32[1,8,512], index: 1, kind: input, shape index: {}]
  %s2 = inlined_call_operand.hbm [shape: f32[2,8,512], index: 2, kind: output, shape index: {}]
  %s3 = sld [smem:[#allocation0]]
  $region45: #{positional_encoding_forward.1} parent=0
    _
  %s5 = ssub.s32 1, %s3
  %s6 = scalar_select 0, %s5, %s3
  $region1: #{positional_encoding_forward.1} parent=0
    #allocation2 [shape = 'u8[32768]{0}', space=vmem, size = 0x8000, scoped, tag = 'input window, operand 0']
    #allocation3 [shape = 's32[2]{0}', space=sflag, size = 0x8, scoped, tag = 'scoped memory for positional_encoding_forward.1']
    #allocation4 [shape = 's32[2]{0}', space=sflag, size = 0x8, scoped, tag = 'scoped memory for positional_encoding_forward.1']
    #allocation5 [shape = 'u8[32768]{0}', space=vmem, size = 0x8000, scoped, tag = 'output window, operand 0']
    %7 = vsyncpa [#allocation3], 0
    %s8 = scalar_lea.sflag [#allocation3], 1
    %9 = vsyncpa %s8, 0
    %10 = vsyncpa [#allocation4], 0
    %s11 = scalar_lea.sflag [#allocation4], 1
    %12 = vsyncpa %s11, 0
    loop: start=0, step=1, limit=4
    $region2: #{positional_encoding_forward.1} parent=1 // loop_pre_header
      _
    $region3: #{positional_encoding_forward.1} parent=1 // loop_header
      %s14 = sphi 0, %s18
      %p15 = scmp.ge.s32.totalorder %s14, 4
      %s21 = sphi 0, %s33
      %s22 = sphi 0, %s29
      %s23 = sphi 0, %s21
      %s24 = sphi 0, %s22
      %s25 = sphi 0, %s23
      %s26 = sphi 0, %s24
      %s38 = sphi 0, %s40
      %s41 = sphi 0, %s38
      %s42 = sphi 0, %s41
      %s58 = sphi 0, %s42
      %s64 = sphi 0, %s66
      %s67 = sphi 0, %s64
      %s68 = sphi 0, %s67
      %s84 = sphi 0, %s68
      %s92 = sphi 0, %s94
      %s95 = sphi 0, %s92
      %s96 = sphi 0, %s95
      %s112 = sphi 0, %s96
    $region4: #{positional_encoding_forward.1} parent=1 // loop_header_branch
      %17 = sbr.rel (%p15) target = $region8
    $region5: #{positional_encoding_forward.1} parent=1 // loop_body
      %s19 = ssub.s32 %s14, 1
      %s20 = ssub.s32 %s14, 2
      %s27 = sadd.s32 1, %s22
      %p28 = scmp.ge.s32.totalorder %s27, 2
      %s29 = scalar_select %p28, 0, %s27
      %s30 = sadd.s32 1, %s21
      %s31 = scalar_select %p28, %s30, %s21
      %p32 = scmp.ge.s32.totalorder %s31, 1
      %s33 = scalar_select %p32, 0, %s31
      %s34 = ssub.s32 %s22, %s29
      %s35 = ssub.s32 %s21, %s33
      %s36 = sor.u32 %s34, %s35
      %p37 = scmp.eq.s32.totalorder %s36, 0
      %s39 = sadd.s32 %s38, 1
      %s40 = scalar_select %p37, %s38, %s39
      %p43 = pneg %p37
      %p44 = scmp.eq.s32.totalorder %s14, 1
      %p45 = por %p43, %p44
      %p46 = scmp.ne.s32.totalorder %s38, %s41
      %p47 = scmp.eq.s32.totalorder %s14, 0
      %p48 = por %p46, %p47
      %p49 = scmp.ne.s32.totalorder %s38, %s41
      %p50 = scmp.eq.s32.totalorder %s19, 1
      %p51 = por %p49, %p50
      %p52 = scmp.ne.s32.totalorder %s41, %s42
      %p53 = scmp.eq.s32.totalorder %s19, 0
      %p54 = por %p52, %p53
      %p55 = scmp.ne.s32.totalorder %s41, %s42
      %p56 = scmp.eq.s32.totalorder %s20, 1
      %p57 = por %p55, %p56
      %p59 = scmp.ne.s32.totalorder %s42, %s58
      %p60 = scmp.eq.s32.totalorder %s20, 0
      %p61 = por %p59, %p60
      %s62 = ssub.s32 %s21, %s33
      %p63 = scmp.eq.s32.totalorder %s62, 0
      %s65 = sadd.s32 %s64, 1
      %s66 = scalar_select %p63, %s64, %s65
      %p69 = pneg %p63
      %p70 = scmp.eq.s32.totalorder %s14, 1
      %p71 = por %p69, %p70
      %p72 = scmp.ne.s32.totalorder %s64, %s67
      %p73 = scmp.eq.s32.totalorder %s14, 0
      %p74 = por %p72, %p73
      %p75 = scmp.ne.s32.totalorder %s64, %s67
      %p76 = scmp.eq.s32.totalorder %s19, 1
      %p77 = por %p75, %p76
      %p78 = scmp.ne.s32.totalorder %s67, %s68
      %p79 = scmp.eq.s32.totalorder %s19, 0
      %p80 = por %p78, %p79
      %p81 = scmp.ne.s32.totalorder %s67, %s68
      %p82 = scmp.eq.s32.totalorder %s20, 1
      %p83 = por %p81, %p82
      %p85 = scmp.ne.s32.totalorder %s68, %s84
      %p86 = scmp.eq.s32.totalorder %s20, 0
      %p87 = por %p85, %p86
      %s88 = ssub.s32 %s22, %s29
      %s89 = ssub.s32 %s21, %s33
      %s90 = sor.u32 %s88, %s89
      %p91 = scmp.eq.s32.totalorder %s90, 0
      %s93 = sadd.s32 %s92, 1
      %s94 = scalar_select %p91, %s92, %s93
      %p97 = pneg %p91
      %p98 = scmp.eq.s32.totalorder %s14, 1
      %p99 = por %p97, %p98
      %p100 = scmp.ne.s32.totalorder %s92, %s95
      %p101 = scmp.eq.s32.totalorder %s14, 0
      %p102 = por %p100, %p101
      %p103 = scmp.ne.s32.totalorder %s92, %s95
      %p104 = scmp.eq.s32.totalorder %s19, 1
      %p105 = por %p103, %p104
      %p106 = scmp.ne.s32.totalorder %s95, %s96
      %p107 = scmp.eq.s32.totalorder %s19, 0
      %p108 = por %p106, %p107
      %p109 = scmp.ne.s32.totalorder %s95, %s96
      %p110 = scmp.eq.s32.totalorder %s20, 1
      %p111 = por %p109, %p110
      %p113 = scmp.ne.s32.totalorder %s96, %s112
      %p114 = scmp.eq.s32.totalorder %s20, 0
      %p115 = por %p113, %p114
      %p116 = scmp.le.s32.totalorder 1, %s14
      %p117 = scmp.lt.s32.totalorder %s14, 3
      %p118 = pnand %p116, %p117
      %p119 = pneg %p118
      // Predicated region
      $region9: #{positional_encoding_forward.1} parent=5 // pred_check
        _
      $region10: #{positional_encoding_forward.1} parent=5 // pred_check_branch
        %121 = sbr.rel (%p118) target = $region12
      $region11: #{positional_encoding_forward.1} parent=5 // pred_region
        %s122 = ssub.s32 %s14, 1
        // Predicated region
        $region13: #{positional_encoding_forward.1} parent=11 // pred_check
          %p123 = pneg %p80
        $region14: #{positional_encoding_forward.1} parent=11 // pred_check_branch
          %125 = sbr.rel (%p123) target = $region16
        $region15: #{positional_encoding_forward.1} parent=11 // pred_region
          %p126 = scmp.lt.s32.totalorder %s23, 0
          %s127 = scalar_select %p126, %s23, 0
          %s128 = smul.addr %s127, 4
          %s129 = smul.addr %s128, 8
          %s130 = scalar_lea.vmem %s1, %s129
        $region16: #{positional_encoding_forward.1} parent=11 // pred_fallthru
          _
      $region12: #{positional_encoding_forward.1} parent=5 // pred_fallthru
        _
      %p131 = scmp.lt.s32.totalorder %s14, 2
      // Predicated region
      $region17: #{positional_encoding_forward.1} parent=5 // pred_check
        %p132 = pneg %p131
      $region18: #{positional_encoding_forward.1} parent=5 // pred_check_branch
        %134 = sbr.rel (%p132) target = $region20
      $region19: #{positional_encoding_forward.1} parent=5 // pred_region
        // Predicated region
        $region21: #{positional_encoding_forward.1} parent=19 // pred_check
          %p135 = pneg %p48
        $region22: #{positional_encoding_forward.1} parent=19 // pred_check_branch
          %137 = sbr.rel (%p135) target = $region24
        $region23: #{positional_encoding_forward.1} parent=19 // pred_region
          %s138 = sand.u32 %s38, 1
          %s139 = scalar_lea.sflag [#allocation3], %s138
          %s140 = sand.u32 %s38, 1
          %s141 = smul.addr %s140, 32
          %s142 = scalar_lea.vmem [#allocation2], %s141
          %s144 = ssub.s32 512, 512
          %145 = vsyncadd %s139, %s144
          %s146 = smul.addr %s21, 4
          %s147 = smul.addr %s22, 4
          %s148 = sadd.s32 %s146, %s147
          %s149 = smul.addr %s148, 128
          %s150 = scalar_lea.hbm %s0, %s149
          %s152 = sshll.u32 %s142, 4
          %s153 = int_to_ptr.vmem [resolvable:$true] %s152
          %155 = dma.hbm_to_vmem [thread:$0]  %s150, 512, %s153, %s139
        $region24: #{positional_encoding_forward.1} parent=19 // pred_fallthru
          _
      $region20: #{positional_encoding_forward.1} parent=5 // pred_fallthru
        _
      %p156 = scmp.le.s32.totalorder 1, %s14
      %p157 = scmp.lt.s32.totalorder %s14, 3
      %p158 = pnand %p156, %p157
      %p159 = pneg %p158
      // Predicated region
      $region25: #{positional_encoding_forward.1} parent=5 // pred_check
        _
      $region26: #{positional_encoding_forward.1} parent=5 // pred_check_branch
        %161 = sbr.rel (%p158) target = $region28
      $region27: #{positional_encoding_forward.1} parent=5 // pred_region
        %s162 = ssub.s32 %s14, 1
        %s163 = sand.u32 %s41, 1
        %s164 = scalar_lea.sflag [#allocation3], %s163
        %s165 = sand.u32 %s41, 1
        %s166 = smul.addr %s165, 32
        %s167 = scalar_lea.vmem [#allocation2], %s166
        // Predicated region
        $region29: #{positional_encoding_forward.1} parent=27 // pred_check
          %p168 = pneg %p54
        $region30: #{positional_encoding_forward.1} parent=27 // pred_check_branch
          %170 = sbr.rel (%p168) target = $region32
        $region31: #{positional_encoding_forward.1} parent=27 // pred_region
          %171 = dma.done %s164, 512
        $region32: #{positional_encoding_forward.1} parent=27 // pred_fallthru
          _
        %s172 = sand.u32 %s41, 1
        %s173 = scalar_lea.sflag [#allocation3], %s172
        %s174 = sand.u32 %s41, 1
        %s175 = smul.addr %s174, 32
        %s176 = scalar_lea.vmem [#allocation2], %s175
        %p177 = pneg %p54
        %p178 = pneg %p51
        %p179 = scmp.lt.s32.totalorder %s23, 0
        %s180 = scalar_select %p179, %s23, 0
        %s181 = smul.addr %s180, 4
        %s182 = smul.addr %s181, 8
        %s183 = scalar_lea.vmem %s1, %s182
        %p184 = pneg %p80
        %p185 = pneg %p77
        %p186 = pneg %p108
        %p187 = pneg %p105
        %s188 = sand.u32 %s95, 1
        %s189 = scalar_lea.sflag [#allocation4], %s188
        %s190 = sand.u32 %s95, 1
        %s191 = smul.addr %s190, 32
        %s192 = scalar_lea.vmem [#allocation5], %s191
        %p193 = scmp.lt.s32.totalorder %s23, 0
        %s194 = scalar_select %p193, %s23, 0
        %s195 = smul.addr %s194, 4
        %s196 = smul.addr %s195, 8
        %s197 = scalar_lea.vmem %s1, %s196
        %v198 = vld [vmem:[%s167] sm:$0xff]
        %v199 = vld [vmem:[%s167 + $0x8] sm:$0xff]
        %v200 = vld [vmem:[%s167 + $0x10] sm:$0xff]
        %v201 = vld [vmem:[%s167 + $0x18] sm:$0xff]
        %v202 = vld [vmem:[%s197] sm:$0xff]
        %v203 = vld [vmem:[%s197 + $0x8] sm:$0xff]
        %v204 = vld [vmem:[%s197 + $0x10] sm:$0xff]
        %v205 = vld [vmem:[%s197 + $0x18] sm:$0xff]
        %v206 = vadd.f32 %v198, %v202
        %v207 = vadd.f32 %v199, %v203
        %v208 = vadd.f32 %v200, %v204
        %v209 = vadd.f32 %v201, %v205
        %210 = vst [vmem:[%s192] sm:$0xff] %v206
        %211 = vst [vmem:[%s192 + $0x8] sm:$0xff] %v207
        %212 = vst [vmem:[%s192 + $0x10] sm:$0xff] %v208
        %213 = vst [vmem:[%s192 + $0x18] sm:$0xff] %v209
        %s214 = sand.u32 %s95, 1
        %s215 = scalar_lea.sflag [#allocation4], %s214
        %s216 = sand.u32 %s95, 1
        %s217 = smul.addr %s216, 32
        %s218 = scalar_lea.vmem [#allocation5], %s217
        // Predicated region
        $region33: #{positional_encoding_forward.1} parent=27 // pred_check
          %p219 = pneg %p105
        $region34: #{positional_encoding_forward.1} parent=27 // pred_check_branch
          %221 = sbr.rel (%p219) target = $region36
        $region35: #{positional_encoding_forward.1} parent=27 // pred_region
          %s223 = ssub.s32 512, 512
          %224 = vsyncadd %s215, %s223
          %s225 = smul.addr %s23, 4
          %s226 = smul.addr %s24, 4
          %s227 = sadd.s32 %s225, %s226
          %s228 = smul.addr %s227, 128
          %s229 = scalar_lea.hbm %s2, %s228
          %s231 = sshll.u32 %s218, 4
          %s232 = int_to_ptr.vmem [resolvable:$true] %s231
          %234 = dma.vmem_to_hbm [thread:$0]  %s232, 512, %s229, %s215
        $region36: #{positional_encoding_forward.1} parent=27 // pred_fallthru
          _
      $region28: #{positional_encoding_forward.1} parent=5 // pred_fallthru
        _
      %p235 = scmp.le.s32.totalorder 2, %s14
      // Predicated region
      $region37: #{positional_encoding_forward.1} parent=5 // pred_check
        %p236 = pneg %p235
      $region38: #{positional_encoding_forward.1} parent=5 // pred_check_branch
        %238 = sbr.rel (%p236) target = $region40
      $region39: #{positional_encoding_forward.1} parent=5 // pred_region
        %s239 = ssub.s32 %s14, 2
        // Predicated region
        $region41: #{positional_encoding_forward.1} parent=39 // pred_check
          %p240 = pneg %p111
        $region42: #{positional_encoding_forward.1} parent=39 // pred_check_branch
          %242 = sbr.rel (%p240) target = $region44
        $region43: #{positional_encoding_forward.1} parent=39 // pred_region
          %s243 = sand.u32 %s96, 1
          %s244 = scalar_lea.sflag [#allocation4], %s243
          %s245 = sand.u32 %s96, 1
          %s246 = smul.addr %s245, 32
          %s247 = scalar_lea.vmem [#allocation5], %s246
          %248 = dma.done %s244, 512
        $region44: #{positional_encoding_forward.1} parent=39 // pred_fallthru
          _
      $region40: #{positional_encoding_forward.1} parent=5 // pred_fallthru
        _
    $region6: #{positional_encoding_forward.1} parent=1 // loop_footer
      %s18 = sadd.s32 1, %s14
    $region7: #{positional_encoding_forward.1} parent=1 // loop_footer_branch
      %13 = sbr.rel target = $region3
    $region8: #{positional_encoding_forward.1} parent=1 // loop_exit
      _
    %249 = vsyncpa [#allocation3], 1
    %s250 = scalar_lea.sflag [#allocation3], 1
    %251 = vsyncpa %s250, 1
    %252 = vsyncpa [#allocation4], 1
    %s253 = scalar_lea.sflag [#allocation4], 1
    %254 = vsyncpa %s253, 1

</llo_original>
